<compile_context>
chip_gen: v7x
topology: tpu7x:2x2x1
jax: 0.10.0
libtpu: 0.0.40
codegen_flags: <defaults>
</compile_context>

<pallas_src>
import functools

import jax
import jax.numpy as jnp
from jax.experimental import pallas as pl
from jax.experimental.pallas import tpu as pltpu


def _round_up(x, m):
    return (x + m - 1) // m * m


def _sigmoid(y):
    # exp -> EUP slot; approx vrcp -> EUP slot; one Newton-Raphson refinement
    # (2 VALU ops) restores ~f32 accuracy so the 1e-5 self-test still passes.
    d = 1.0 + jnp.exp(-y)
    r = pl.reciprocal(d, approx=True)
    return r * (2.0 - d * r)


def _targetnet_kernel(x_ref, p_ref, o_ref, *, meta, bt, ts):
    """One grid step: ts spatial positions x bt samples through the layer chain.

    x_ref: (ts, cip1, bt)     activations: channels on sublanes, batch on lanes
    p_ref: (rp, bt)           packed per-sample params (per layer: weights, bias)
    o_ref: (ts, co_last, bt)  final-layer output (lane-dense, batch on lanes)
    meta:  tuple of (ci, co, row_offset, padded_rows) per layer (static).
    """
    # Hoist all weight/bias views out of the spatial loop: loaded once per step.
    ws, bs = [], []
    for (ci, co, off, rows) in meta:
        seg = p_ref[off:off + rows, :].astype(jnp.float32)   # 8-aligned slice
        ws.append(seg[:co * ci].reshape(co, ci, bt))          # (co, ci, bt)
        bs.append(seg[co * ci:co * ci + co])                  # (co, bt)
    n_layers = len(meta)
    for t in range(ts):
        h = x_ref[t]                                          # (cip1, bt)
        for l in range(n_layers):
            # VPU broadcast multiply + XLU sublane reduce.  At bt <= 1024 the
            # layer-1 intermediate (co*ci*bt f32) stays <= 2 MiB, so no
            # accumulation-loop restructuring is needed.
            y = jnp.sum(ws[l] * h[None, :, :], axis=1) + bs[l]   # (co_l, bt)
            h = _sigmoid(y) if l < n_layers - 1 else y
        o_ref[t] = h                                          # lane-dense store


def _pack_params(paras, cin1_pad, n_layers=5, param_dtype=jnp.float32):
    """Pack per-sample weights & biases into one (B, Rp) slab.

    Layer l contributes co_l*ci_l weight rows (row o*ci_l + i holds W[:, o, i])
    followed by co_l bias rows, with ONLY the segment end padded to the next
    multiple of 8 (true cout rows are kept -> less padded HBM traffic).
    Layer 1's cin is padded to cin1_pad to match the 8-padded x block; for the
    remaining layers cin equals the previous layer's true cout.
    """
    segs, meta, off, prev_co = [], [], 0, None
    for i in range(1, n_layers + 1):
        w = paras[f'target_fc{i}w']                 # (B, Co, Ci, 1, 1)
        b = paras[f'target_fc{i}b']                 # (B, Co)
        bsz, co, ci = w.shape[0], w.shape[1], w.shape[2]
        if i > 1:
            assert ci == prev_co, "layer chain channel mismatch"
            ci_p = ci
        else:
            ci_p = cin1_pad
        w3 = w.reshape(bsz, co, ci).astype(param_dtype)
        if ci_p != ci:
            w3 = jnp.pad(w3, ((0, 0), (0, 0), (0, ci_p - ci)))
        seg = jnp.concatenate(
            [w3.reshape(bsz, co * ci_p), b.astype(param_dtype)], axis=1)
        rows = co * ci_p + co
        rows_p = _round_up(rows, 8)
        if rows_p != rows:
            seg = jnp.pad(seg, ((0, 0), (0, rows_p - rows)))
        segs.append(seg)
        meta.append((ci_p, co, off, rows_p))
        off += rows_p
        prev_co = co
    packed = jnp.concatenate(segs, axis=1)          # (B, Rp), Rp % 8 == 0
    return packed, tuple(meta)


def target_net_forward(x_nchw, paras, *, max_block_b=512, spatial_block=8,
                       param_dtype=jnp.float32):
    """x_nchw: (B, C0, H, W) float32 (NCHW). Returns squeezed TargetNet output.

    param_dtype=jnp.bfloat16 halves parameter HBM traffic (upcast in-kernel)
    but drops accuracy to ~1e-3; keep float32 when 1e-5 agreement is required.
    """
    B, C0, H, W = x_nchw.shape
    S = H * W
    cip1 = _round_up(C0, 8)

    packed, meta = _pack_params(paras, cip1, param_dtype=param_dtype)
    rp = packed.shape[1]
    co_last = meta[-1][1]                           # == 1 for hyperIQA

    # Batch block: multiple of 128 lanes (full-width unmasked vst), capped at
    # 1024 so the params double-buffer fits v5e's 16 MiB scoped VMEM (and
    # v7x's 32 MiB scoped / 64 MiB physical per TC).
    bt = max(128, min((int(max_block_b) // 128) * 128, _round_up(B, 128), 1024))
    bp = _round_up(B, bt)
    n_blocks = bp // bt

    # Spatial block: cuts grid steps by ts and grows the x/out DMAs by ts
    # (no-op for the S=1 hyperIQA case).
    ts = max(1, min(int(spatial_block), S))
    sp = _round_up(S, ts)
    n_s = sp // ts

    # Activations: (B, C0, H, W) -> (S, C0, B); channels on sublanes, batch on
    # lanes.  Single fused pad (spatial->ts multiple, channels->8 multiple,
    # batch->block multiple); skipped entirely when nothing needs padding.
    x = jnp.transpose(x_nchw.reshape(B, C0, S).astype(jnp.float32), (2, 1, 0))
    if (sp, cip1, bp) != (S, C0, B):
        x = jnp.pad(x, ((0, sp - S), (0, cip1 - C0), (0, bp - B)))

    # Packed params: (B, Rp) -> (Rp, Bpad), batch on lanes.
    params = jnp.transpose(packed, (1, 0))
    if bp != B:
        params = jnp.pad(params, ((0, 0), (0, bp - B)))

    kernel = functools.partial(_targetnet_kernel, meta=meta, bt=bt, ts=ts)

    macs = sum(ci * co for (ci, co, _, _) in meta)
    exps = sum(co for (_, co, _, _) in meta[:-1])
    cost = pl.CostEstimate(
        flops=int(2 * macs * bp * sp),
        transcendentals=int(2 * exps * bp * sp),      # exp + approx recip
        bytes_accessed=int(4 * bp * sp * (cip1 + co_last)
                           + params.dtype.itemsize * rp * bp),
    )

    out = pl.pallas_call(
        kernel,
        out_shape=jax.ShapeDtypeStruct((sp, co_last, bp), jnp.float32),
        grid_spec=pltpu.PrefetchScalarGridSpec(
            num_scalar_prefetch=0,
            grid=(n_blocks, n_s),
            in_specs=[
                pl.BlockSpec((ts, cip1, bt), lambda bb, s: (s, 0, bb)),
                # Param block index is independent of `s`: fetched once per
                # batch block and reused across all spatial steps.
                pl.BlockSpec((rp, bt), lambda bb, s: (0, bb)),
            ],
            out_specs=pl.BlockSpec((ts, co_last, bt), lambda bb, s: (s, 0, bb)),
        ),
        compiler_params=pltpu.CompilerParams(
            # No accumulation across either grid axis -> both shardable; on
            # v7x the two TensorCores split (batch_block, spatial_block).
            dimension_semantics=("parallel", "parallel")),
        cost_estimate=cost,
    )(x, params)

    # (Spad, Co, Bpad) -> (B, Co, H, W), then mimic torch's .squeeze().
    # TODO(synk): consumers that can read the (S, Co, B) layout directly could
    # drop this transpose (one full HBM round trip).
    out = jnp.transpose(out[:S, :, :B], (2, 1, 0)).reshape(B, co_last, H, W)
    return jnp.squeeze(out)


def _reference_forward(x_nchw, paras):
    """Pure-JAX reference mirroring the PyTorch forward exactly."""
    B, C0, H, W = x_nchw.shape
    h = x_nchw.reshape(B, C0, H * W).astype(jnp.float32)
    sigs = [True, True, True, True, False]
    for i, sig in zip(range(1, 6), sigs):
        w = paras[f'target_fc{i}w']
        b = paras[f'target_fc{i}b']
        w2d = w.reshape(w.shape[0], w.shape[1], w.shape[2])     # (B, Co, Ci)
        h = jnp.einsum('boi,bis->bos', w2d, h) + b[:, :, None]
        if sig:
            h = 1.0 / (1.0 + jnp.exp(-h))
    out = h.reshape(B, -1, H, W)
    return jnp.squeeze(out)


def _make_paras(key, batch, dims):
    """dims = [C0, C1, ..., C5]; returns dict of (B,Cout,Cin,1,1)/(B,Cout)."""
    paras = {}
    for i in range(1, 6):
        cin, cout = dims[i - 1], dims[i]
        key, kw, kb = jax.random.split(key, 3)
        paras[f'target_fc{i}w'] = (
            0.1 * jax.random.normal(kw, (batch, cout, cin, 1, 1), jnp.float32))
        paras[f'target_fc{i}b'] = (
            0.1 * jax.random.normal(kb, (batch, cout), jnp.float32))
    return paras


if __name__ == "__main__":
    dims = [32, 16, 8, 8, 4, 1]                 # C0 -> ... -> 1 (hyperIQA-style)

    # Case 1: tiny batch, 1x1 spatial (the hyperIQA configuration).
    key = jax.random.PRNGKey(0)
    B, H, W = 2, 1, 1
    key, kx = jax.random.split(key)
    x = jax.random.normal(kx, (B, dims[0], H, W), jnp.float32)
    paras = _make_paras(key, B, dims)
    out = jax.block_until_ready(target_net_forward(x, paras))
    ref = _reference_forward(x, paras)
    assert out.shape == ref.shape, (out.shape, ref.shape)
    assert jnp.allclose(out, ref, atol=1e-5, rtol=1e-5), "case1 mismatch"

    # Case 2: larger batch -> batch padding + multiple batch grid blocks.
    key = jax.random.PRNGKey(0)
    B2 = 260
    key, kx = jax.random.split(key)
    x2 = jax.random.normal(kx, (B2, dims[0], 1, 1), jnp.float32)
    paras2 = _make_paras(key, B2, dims)
    out2 = jax.block_until_ready(target_net_forward(x2, paras2, max_block_b=128))
    ref2 = _reference_forward(x2, paras2)
    assert out2.shape == ref2.shape, (out2.shape, ref2.shape)
    assert jnp.allclose(out2, ref2, atol=1e-5, rtol=1e-5), "case2 mismatch"

    # Case 3: spatial extent > 1 -> spatial blocking (ts=8, two spatial steps).
    key = jax.random.PRNGKey(0)
    B3, H3, W3 = 2, 4, 4
    key, kx = jax.random.split(key)
    x3 = jax.random.normal(kx, (B3, dims[0], H3, W3), jnp.float32)
    paras3 = _make_paras(key, B3, dims)
    out3 = jax.block_until_ready(
        target_net_forward(x3, paras3, spatial_block=8))
    ref3 = _reference_forward(x3, paras3)
    assert out3.shape == ref3.shape, (out3.shape, ref3.shape)
    assert jnp.allclose(out3, ref3, atol=1e-5, rtol=1e-5), "case3 mismatch"

    print("KERNEL_OK")
</pallas_src>

<mosaic_0001>
module attributes {stable_mosaic.version = 11 : i64} {
  func.func @_targetnet_kernel(%arg0: i32, %arg1: i32, %arg2: memref<1x32x128xf32, #tpu.memory_space<vmem>>, %arg3: memref<784x128xf32, #tpu.memory_space<vmem>>, %arg4: memref<1x1x128xf32, #tpu.memory_space<vmem>>) attributes {dimension_semantics = [#tpu.dimension_semantics<parallel>, #tpu.dimension_semantics<parallel>], iteration_bounds = array<i64: 1, 1>, scalar_prefetch = 0 : i64, scratch_operands = 0 : i64, tpu.core_type = #tpu.core_type<tc>, window_params = [{transform_indices = @transform_0, window_bounds = array<i64: 1, 32, 128>}, {transform_indices = @transform_1, window_bounds = array<i64: 784, 128>}, {transform_indices = @transform_2, window_bounds = array<i64: 1, 1, 128>}]} {
    %c0 = arith.constant 0 : index
    %c0_0 = arith.constant 0 : index
    %0 = vector.load %arg3[%c0, %c0_0] : memref<784x128xf32, #tpu.memory_space<vmem>>, vector<528x128xf32>
    %1 = vector.extract_strided_slice %0 {offsets = [0, 0], sizes = [512, 128], strides = [1, 1]} : vector<528x128xf32> to vector<512x128xf32>
    %2 = vector.shape_cast %1 : vector<512x128xf32> to vector<16x32x128xf32>
    %3 = vector.extract_strided_slice %0 {offsets = [512, 0], sizes = [16, 128], strides = [1, 1]} : vector<528x128xf32> to vector<16x128xf32>
    %c528 = arith.constant 528 : index
    %c0_1 = arith.constant 0 : index
    %4 = vector.load %arg3[%c528, %c0_1] : memref<784x128xf32, #tpu.memory_space<vmem>>, vector<136x128xf32>
    %5 = vector.extract_strided_slice %4 {offsets = [0, 0], sizes = [128, 128], strides = [1, 1]} : vector<136x128xf32> to vector<128x128xf32>
    %6 = vector.shape_cast %5 : vector<128x128xf32> to vector<8x16x128xf32>
    %7 = vector.extract_strided_slice %4 {offsets = [128, 0], sizes = [8, 128], strides = [1, 1]} : vector<136x128xf32> to vector<8x128xf32>
    %c664 = arith.constant 664 : index
    %c0_2 = arith.constant 0 : index
    %8 = vector.load %arg3[%c664, %c0_2] : memref<784x128xf32, #tpu.memory_space<vmem>>, vector<72x128xf32>
    %9 = vector.extract_strided_slice %8 {offsets = [0, 0], sizes = [64, 128], strides = [1, 1]} : vector<72x128xf32> to vector<64x128xf32>
    %10 = vector.shape_cast %9 : vector<64x128xf32> to vector<8x8x128xf32>
    %11 = vector.extract_strided_slice %8 {offsets = [64, 0], sizes = [8, 128], strides = [1, 1]} : vector<72x128xf32> to vector<8x128xf32>
    %c736 = arith.constant 736 : index
    %c0_3 = arith.constant 0 : index
    %12 = vector.load %arg3[%c736, %c0_3] : memref<784x128xf32, #tpu.memory_space<vmem>>, vector<40x128xf32>
    %13 = vector.extract_strided_slice %12 {offsets = [0, 0], sizes = [32, 128], strides = [1, 1]} : vector<40x128xf32> to vector<32x128xf32>
    %14 = vector.shape_cast %13 : vector<32x128xf32> to vector<4x8x128xf32>
    %15 = vector.extract_strided_slice %12 {offsets = [32, 0], sizes = [4, 128], strides = [1, 1]} : vector<40x128xf32> to vector<4x128xf32>
    %c776 = arith.constant 776 : index
    %c0_4 = arith.constant 0 : index
    %16 = vector.load %arg3[%c776, %c0_4] : memref<784x128xf32, #tpu.memory_space<vmem>>, vector<8x128xf32>
    %17 = vector.extract_strided_slice %16 {offsets = [0, 0], sizes = [4, 128], strides = [1, 1]} : vector<8x128xf32> to vector<4x128xf32>
    %18 = vector.shape_cast %17 : vector<4x128xf32> to vector<1x4x128xf32>
    %19 = vector.extract_strided_slice %16 {offsets = [4, 0], sizes = [1, 128], strides = [1, 1]} : vector<8x128xf32> to vector<1x128xf32>
    %c0_5 = arith.constant 0 : index
    %c0_6 = arith.constant 0 : index
    %c0_7 = arith.constant 0 : index
    %20 = vector.load %arg2[%c0_5, %c0_6, %c0_7] : memref<1x32x128xf32, #tpu.memory_space<vmem>>, vector<1x32x128xf32>
    %21 = vector.shape_cast %20 : vector<1x32x128xf32> to vector<32x128xf32>
    %22 = vector.shape_cast %21 : vector<32x128xf32> to vector<1x32x128xf32>
    %23 = vector.broadcast %22 : vector<1x32x128xf32> to vector<16x32x128xf32>
    %24 = arith.mulf %2, %23 : vector<16x32x128xf32>
    %cst = arith.constant dense<0.000000e+00> : vector<16x128xf32>
    %25 = vector.multi_reduction <add>, %24, %cst [1] : vector<16x32x128xf32> to vector<16x128xf32>
    %26 = arith.addf %25, %3 : vector<16x128xf32>
    %cst_8 = arith.constant 0.000000e+00 : f32
    %27 = vector.broadcast %cst_8 : f32 to vector<16x128xf32>
    %28 = arith.subf %27, %26 : vector<16x128xf32>
    %29 = math.exp %28 : vector<16x128xf32>
    %cst_9 = arith.constant 1.000000e+00 : f32
    %30 = vector.broadcast %cst_9 : f32 to vector<16x128xf32>
    %31 = arith.addf %30, %29 : vector<16x128xf32>
    %32 = tpu.reciprocal %31 {approx = true} : vector<16x128xf32> -> vector<16x128xf32>
    %33 = arith.mulf %31, %32 : vector<16x128xf32>
    %cst_10 = arith.constant 2.000000e+00 : f32
    %34 = vector.broadcast %cst_10 : f32 to vector<16x128xf32>
    %35 = arith.subf %34, %33 : vector<16x128xf32>
    %36 = arith.mulf %32, %35 : vector<16x128xf32>
    %37 = vector.shape_cast %36 : vector<16x128xf32> to vector<1x16x128xf32>
    %38 = vector.broadcast %37 : vector<1x16x128xf32> to vector<8x16x128xf32>
    %39 = arith.mulf %6, %38 : vector<8x16x128xf32>
    %cst_11 = arith.constant dense<0.000000e+00> : vector<8x128xf32>
    %40 = vector.multi_reduction <add>, %39, %cst_11 [1] : vector<8x16x128xf32> to vector<8x128xf32>
    %41 = arith.addf %40, %7 : vector<8x128xf32>
    %cst_12 = arith.constant 0.000000e+00 : f32
    %42 = vector.broadcast %cst_12 : f32 to vector<8x128xf32>
    %43 = arith.subf %42, %41 : vector<8x128xf32>
    %44 = math.exp %43 : vector<8x128xf32>
    %cst_13 = arith.constant 1.000000e+00 : f32
    %45 = vector.broadcast %cst_13 : f32 to vector<8x128xf32>
    %46 = arith.addf %45, %44 : vector<8x128xf32>
    %47 = tpu.reciprocal %46 {approx = true} : vector<8x128xf32> -> vector<8x128xf32>
    %48 = arith.mulf %46, %47 : vector<8x128xf32>
    %cst_14 = arith.constant 2.000000e+00 : f32
    %49 = vector.broadcast %cst_14 : f32 to vector<8x128xf32>
    %50 = arith.subf %49, %48 : vector<8x128xf32>
    %51 = arith.mulf %47, %50 : vector<8x128xf32>
    %52 = vector.shape_cast %51 : vector<8x128xf32> to vector<1x8x128xf32>
    %53 = vector.broadcast %52 : vector<1x8x128xf32> to vector<8x8x128xf32>
    %54 = arith.mulf %10, %53 : vector<8x8x128xf32>
    %cst_15 = arith.constant dense<0.000000e+00> : vector<8x128xf32>
    %55 = vector.multi_reduction <add>, %54, %cst_15 [1] : vector<8x8x128xf32> to vector<8x128xf32>
    %56 = arith.addf %55, %11 : vector<8x128xf32>
    %cst_16 = arith.constant 0.000000e+00 : f32
    %57 = vector.broadcast %cst_16 : f32 to vector<8x128xf32>
    %58 = arith.subf %57, %56 : vector<8x128xf32>
    %59 = math.exp %58 : vector<8x128xf32>
    %cst_17 = arith.constant 1.000000e+00 : f32
    %60 = vector.broadcast %cst_17 : f32 to vector<8x128xf32>
    %61 = arith.addf %60, %59 : vector<8x128xf32>
    %62 = tpu.reciprocal %61 {approx = true} : vector<8x128xf32> -> vector<8x128xf32>
    %63 = arith.mulf %61, %62 : vector<8x128xf32>
    %cst_18 = arith.constant 2.000000e+00 : f32
    %64 = vector.broadcast %cst_18 : f32 to vector<8x128xf32>
    %65 = arith.subf %64, %63 : vector<8x128xf32>
    %66 = arith.mulf %62, %65 : vector<8x128xf32>
    %67 = vector.shape_cast %66 : vector<8x128xf32> to vector<1x8x128xf32>
    %68 = vector.broadcast %67 : vector<1x8x128xf32> to vector<4x8x128xf32>
    %69 = arith.mulf %14, %68 : vector<4x8x128xf32>
    %cst_19 = arith.constant dense<0.000000e+00> : vector<4x128xf32>
    %70 = vector.multi_reduction <add>, %69, %cst_19 [1] : vector<4x8x128xf32> to vector<4x128xf32>
    %71 = arith.addf %70, %15 : vector<4x128xf32>
    %cst_20 = arith.constant 0.000000e+00 : f32
    %72 = vector.broadcast %cst_20 : f32 to vector<4x128xf32>
    %73 = arith.subf %72, %71 : vector<4x128xf32>
    %74 = math.exp %73 : vector<4x128xf32>
    %cst_21 = arith.constant 1.000000e+00 : f32
    %75 = vector.broadcast %cst_21 : f32 to vector<4x128xf32>
    %76 = arith.addf %75, %74 : vector<4x128xf32>
    %77 = tpu.reciprocal %76 {approx = true} : vector<4x128xf32> -> vector<4x128xf32>
    %78 = arith.mulf %76, %77 : vector<4x128xf32>
    %cst_22 = arith.constant 2.000000e+00 : f32
    %79 = vector.broadcast %cst_22 : f32 to vector<4x128xf32>
    %80 = arith.subf %79, %78 : vector<4x128xf32>
    %81 = arith.mulf %77, %80 : vector<4x128xf32>
    %82 = vector.shape_cast %81 : vector<4x128xf32> to vector<1x4x128xf32>
    %83 = arith.mulf %18, %82 : vector<1x4x128xf32>
    %cst_23 = arith.constant dense<0.000000e+00> : vector<1x128xf32>
    %84 = vector.multi_reduction <add>, %83, %cst_23 [1] : vector<1x4x128xf32> to vector<1x128xf32>
    %85 = arith.addf %84, %19 : vector<1x128xf32>
    %c0_24 = arith.constant 0 : index
    %c0_25 = arith.constant 0 : index
    %c0_26 = arith.constant 0 : index
    %86 = vector.load %arg4[%c0_24, %c0_25, %c0_26] : memref<1x1x128xf32, #tpu.memory_space<vmem>>, vector<1x1x128xf32>
    %87 = vector.shape_cast %86 : vector<1x1x128xf32> to vector<1x128xf32>
    %88 = vector.shape_cast %85 : vector<1x128xf32> to vector<1x1x128xf32>
    tpu.vector_store %arg4[%c0_24, %c0_25, %c0_26], %88 {strides = array<i32>} : memref<1x1x128xf32, #tpu.memory_space<vmem>>, vector<1x1x128xf32>,
    return
  }
  func.func @transform_0(%arg0: i32, %arg1: i32) -> (i32, i32, i32) {
    %c0_i32 = arith.constant 0 : i32
    %c0_i32_0 = arith.constant 0 : i32
    return %arg1, %c0_i32, %arg0 : i32, i32, i32
  }
  func.func @transform_1(%arg0: i32, %arg1: i32) -> (i32, i32) {
    %c0_i32 = arith.constant 0 : i32
    %c0_i32_0 = arith.constant 0 : i32
    return %c0_i32, %arg0 : i32, i32
  }
  func.func @transform_2(%arg0: i32, %arg1: i32) -> (i32, i32, i32) {
    %c0_i32 = arith.constant 0 : i32
    %c0_i32_0 = arith.constant 0 : i32
    return %arg1, %c0_i32, %arg0 : i32, i32, i32
  }
}

</mosaic_0001>

<llo_original>
// kernel: tpu_custom_call.1
$region0: #{tpu_custom_call.1}
  #allocation0 [shape = 'u32[]', space=smem, size = 0x4, offset = 0x4, fixed_abs, tag = 'smem constant byte address 0x4 - core index']
  #allocation1 [shape = 'u32[144,128]{1,0:T(1,128)}', space=vmem, size = 0x12000, scoped, tag = 'internal scratch']
  %s0 = inlined_call_operand.hbm [shape: f32[1,32,128], index: 0, kind: input, shape index: {}]
  %s1 = inlined_call_operand.hbm [shape: f32[784,128], index: 1, kind: input, shape index: {}]
  %s2 = inlined_call_operand.hbm [shape: f32[1,1,128], index: 2, kind: output, shape index: {}]
  %s3 = sld [smem:[#allocation0]]
  $region26: #{tpu_custom_call.1} parent=0
    _
  %s5 = ssub.s32 1, %s3
  %s6 = scalar_select 0, %s5, %s3
  $region1: #{tpu_custom_call.1} parent=0
    #allocation2 [shape = 'u8[16384]{0}', space=vmem, size = 0x4000, scoped, tag = 'input window, operand 0, single buffered']
    #allocation3 [shape = 's32[1]{0}', space=sflag, size = 0x4, scoped, tag = 'scoped memory for tpu_custom_call.1']
    #allocation4 [shape = 's32[1]{0}', space=sflag, size = 0x4, scoped, tag = 'scoped memory for tpu_custom_call.1']
    #allocation5 [shape = 'u8[401408]{0}', space=vmem, size = 0x62000, scoped, tag = 'input window, operand 1, single buffered']
    #allocation6 [shape = 's32[1]{0}', space=sflag, size = 0x4, scoped, tag = 'scoped memory for tpu_custom_call.1']
    #allocation7 [shape = 'u8[512]{0}', space=vmem, size = 0x400, scoped, tag = 'output window, operand 0, single buffered']
    %7 = vsyncpa [#allocation3], 0
    %8 = vsyncpa [#allocation6], 0
    %9 = vsyncpa [#allocation4], 0
    // Predicated region
    $region2: #{tpu_custom_call.1} parent=1 // pred_check
      _
    $region3: #{tpu_custom_call.1} parent=1 // pred_check_branch
      %11 = sbr.rel (0) target = $region5
    $region4: #{tpu_custom_call.1} parent=1 // pred_region
      %s13 = ssub.s32 512, 512
      %14 = vsyncadd [#allocation3], %s13
      %s15 = sshll.u32 [#allocation2], 4
      %s16 = int_to_ptr.vmem [resolvable:$true] %s15
      %21 = dma.hbm_to_vmem [thread:$0]  %s0, 512, %s16, [#allocation3], 128, 128, 8
    $region5: #{tpu_custom_call.1} parent=1 // pred_fallthru
      _
    // Predicated region
    $region6: #{tpu_custom_call.1} parent=1 // pred_check
      _
    $region7: #{tpu_custom_call.1} parent=1 // pred_check_branch
      %23 = sbr.rel (0) target = $region9
    $region8: #{tpu_custom_call.1} parent=1 // pred_region
      %s25 = ssub.s32 12544, 12544
      %26 = vsyncadd [#allocation6], %s25
      %s27 = sshll.u32 [#allocation5], 4
      %s28 = int_to_ptr.vmem [resolvable:$true] %s27
      %33 = dma.hbm_to_vmem [thread:$0]  %s1, 12544, %s28, [#allocation6], 128, 128, 8
    $region9: #{tpu_custom_call.1} parent=1 // pred_fallthru
      _
    // Predicated region
    $region10: #{tpu_custom_call.1} parent=1 // pred_check
      _
    $region11: #{tpu_custom_call.1} parent=1 // pred_check_branch
      %35 = sbr.rel (0) target = $region13
    $region12: #{tpu_custom_call.1} parent=1 // pred_region
      %36 = dma.done [#allocation3], 512
    $region13: #{tpu_custom_call.1} parent=1 // pred_fallthru
      _
    // Predicated region
    $region14: #{tpu_custom_call.1} parent=1 // pred_check
      _
    $region15: #{tpu_custom_call.1} parent=1 // pred_check_branch
      %38 = sbr.rel (0) target = $region17
    $region16: #{tpu_custom_call.1} parent=1 // pred_region
      %39 = dma.done [#allocation6], 12544
    $region17: #{tpu_custom_call.1} parent=1 // pred_fallthru
      _
    %v40 = vld [vmem:[#allocation5] sm:$0xff]
    %v41 = vld [vmem:[#allocation5 + $0x8] sm:$0xff]
    %v42 = vld [vmem:[#allocation5 + $0x10] sm:$0xff]
    %v43 = vld [vmem:[#allocation5 + $0x18] sm:$0xff]
    %v44 = vld [vmem:[#allocation5 + $0x20] sm:$0xff]
    %v45 = vld [vmem:[#allocation5 + $0x28] sm:$0xff]
    %v46 = vld [vmem:[#allocation5 + $0x30] sm:$0xff]
    %v47 = vld [vmem:[#allocation5 + $0x38] sm:$0xff]
    %v48 = vld [vmem:[#allocation5 + $0x40] sm:$0xff]
    %v49 = vld [vmem:[#allocation5 + $0x48] sm:$0xff]
    %v50 = vld [vmem:[#allocation5 + $0x50] sm:$0xff]
    %v51 = vld [vmem:[#allocation5 + $0x58] sm:$0xff]
    %v52 = vld [vmem:[#allocation5 + $0x60] sm:$0xff]
    %v53 = vld [vmem:[#allocation5 + $0x68] sm:$0xff]
    %v54 = vld [vmem:[#allocation5 + $0x70] sm:$0xff]
    %v55 = vld [vmem:[#allocation5 + $0x78] sm:$0xff]
    %v56 = vld [vmem:[#allocation5 + $0x80] sm:$0xff]
    %v57 = vld [vmem:[#allocation5 + $0x88] sm:$0xff]
    %v58 = vld [vmem:[#allocation5 + $0x90] sm:$0xff]
    %v59 = vld [vmem:[#allocation5 + $0x98] sm:$0xff]
    %v60 = vld [vmem:[#allocation5 + $0xa0] sm:$0xff]
    %v61 = vld [vmem:[#allocation5 + $0xa8] sm:$0xff]
    %v62 = vld [vmem:[#allocation5 + $0xb0] sm:$0xff]
    %v63 = vld [vmem:[#allocation5 + $0xb8] sm:$0xff]
    %v64 = vld [vmem:[#allocation5 + $0xc0] sm:$0xff]
    %v65 = vld [vmem:[#allocation5 + $0xc8] sm:$0xff]
    %v66 = vld [vmem:[#allocation5 + $0xd0] sm:$0xff]
    %v67 = vld [vmem:[#allocation5 + $0xd8] sm:$0xff]
    %v68 = vld [vmem:[#allocation5 + $0xe0] sm:$0xff]
    %v69 = vld [vmem:[#allocation5 + $0xe8] sm:$0xff]
    %v70 = vld [vmem:[#allocation5 + $0xf0] sm:$0xff]
    %v71 = vld [vmem:[#allocation5 + $0xf8] sm:$0xff]
    %v72 = vld [vmem:[#allocation5 + $0x100] sm:$0xff]
    %v73 = vld [vmem:[#allocation5 + $0x108] sm:$0xff]
    %v74 = vld [vmem:[#allocation5 + $0x110] sm:$0xff]
    %v75 = vld [vmem:[#allocation5 + $0x118] sm:$0xff]
    %v76 = vld [vmem:[#allocation5 + $0x120] sm:$0xff]
    %v77 = vld [vmem:[#allocation5 + $0x128] sm:$0xff]
    %v78 = vld [vmem:[#allocation5 + $0x130] sm:$0xff]
    %v79 = vld [vmem:[#allocation5 + $0x138] sm:$0xff]
    %v80 = vld [vmem:[#allocation5 + $0x140] sm:$0xff]
    %v81 = vld [vmem:[#allocation5 + $0x148] sm:$0xff]
    %v82 = vld [vmem:[#allocation5 + $0x150] sm:$0xff]
    %v83 = vld [vmem:[#allocation5 + $0x158] sm:$0xff]
    %v84 = vld [vmem:[#allocation5 + $0x160] sm:$0xff]
    %v85 = vld [vmem:[#allocation5 + $0x168] sm:$0xff]
    %v86 = vld [vmem:[#allocation5 + $0x170] sm:$0xff]
    %v87 = vld [vmem:[#allocation5 + $0x178] sm:$0xff]
    %v88 = vld [vmem:[#allocation5 + $0x180] sm:$0xff]
    %v89 = vld [vmem:[#allocation5 + $0x188] sm:$0xff]
    %v90 = vld [vmem:[#allocation5 + $0x190] sm:$0xff]
    %v91 = vld [vmem:[#allocation5 + $0x198] sm:$0xff]
    %v92 = vld [vmem:[#allocation5 + $0x1a0] sm:$0xff]
    %v93 = vld [vmem:[#allocation5 + $0x1a8] sm:$0xff]
    %v94 = vld [vmem:[#allocation5 + $0x1b0] sm:$0xff]
    %v95 = vld [vmem:[#allocation5 + $0x1b8] sm:$0xff]
    %v96 = vld [vmem:[#allocation5 + $0x1c0] sm:$0xff]
    %v97 = vld [vmem:[#allocation5 + $0x1c8] sm:$0xff]
    %v98 = vld [vmem:[#allocation5 + $0x1d0] sm:$0xff]
    %v99 = vld [vmem:[#allocation5 + $0x1d8] sm:$0xff]
    %v100 = vld [vmem:[#allocation5 + $0x1e0] sm:$0xff]
    %v101 = vld [vmem:[#allocation5 + $0x1e8] sm:$0xff]
    %v102 = vld [vmem:[#allocation5 + $0x1f0] sm:$0xff]
    %v103 = vld [vmem:[#allocation5 + $0x1f8] sm:$0xff]
    %v104 = vld [vmem:[#allocation5 + $0x200] sm:$0xff]
    %v105 = vld [vmem:[#allocation5 + $0x208] sm:$0xff]
    %v106 = vld [vmem:[#allocation5 + $0x210] sm:$0xff]
    %v107 = vld [vmem:[#allocation5 + $0x218] sm:$0xff]
    %v108 = vld [vmem:[#allocation5 + $0x220] sm:$0xff]
    %v109 = vld [vmem:[#allocation5 + $0x228] sm:$0xff]
    %v110 = vld [vmem:[#allocation5 + $0x230] sm:$0xff]
    %v111 = vld [vmem:[#allocation5 + $0x238] sm:$0xff]
    %v112 = vld [vmem:[#allocation5 + $0x240] sm:$0xff]
    %v113 = vld [vmem:[#allocation5 + $0x248] sm:$0xff]
    %v114 = vld [vmem:[#allocation5 + $0x250] sm:$0xff]
    %v115 = vld [vmem:[#allocation5 + $0x258] sm:$0xff]
    %v116 = vld [vmem:[#allocation5 + $0x260] sm:$0xff]
    %v117 = vld [vmem:[#allocation5 + $0x268] sm:$0xff]
    %v118 = vld [vmem:[#allocation5 + $0x270] sm:$0xff]
    %v119 = vld [vmem:[#allocation5 + $0x278] sm:$0xff]
    %v120 = vld [vmem:[#allocation5 + $0x280] sm:$0xff]
    %v121 = vld [vmem:[#allocation5 + $0x288] sm:$0xff]
    %v122 = vld [vmem:[#allocation5 + $0x290] sm:$0xff]
    %v123 = vld [vmem:[#allocation5 + $0x298] sm:$0xff]
    %v124 = vld [vmem:[#allocation5 + $0x2a0] sm:$0xff]
    %v125 = vld [vmem:[#allocation5 + $0x2a8] sm:$0xff]
    %v126 = vld [vmem:[#allocation5 + $0x2b0] sm:$0xff]
    %v127 = vld [vmem:[#allocation5 + $0x2b8] sm:$0xff]
    %v128 = vld [vmem:[#allocation5 + $0x2c0] sm:$0xff]
    %v129 = vld [vmem:[#allocation5 + $0x2c8] sm:$0xff]
    %v130 = vld [vmem:[#allocation5 + $0x2d0] sm:$0xff]
    %v131 = vld [vmem:[#allocation5 + $0x2d8] sm:$0xff]
    %v132 = vld [vmem:[#allocation5 + $0x2e0] sm:$0xff]
    %v133 = vld [vmem:[#allocation5 + $0x2e8] sm:$0xff]
    %v134 = vld [vmem:[#allocation5 + $0x2f0] sm:$0xff]
    %v135 = vld [vmem:[#allocation5 + $0x2f8] sm:$0xff]
    %v136 = vld [vmem:[#allocation5 + $0x300] sm:$0xff]
    %v137 = vld [vmem:[#allocation5 + $0x308] sm:$0xff]
    %v138 = vld [vmem:[#allocation2] sm:$0xff]
    %v139 = vld [vmem:[#allocation2 + $0x8] sm:$0xff]
    %v140 = vld [vmem:[#allocation2 + $0x10] sm:$0xff]
    %v141 = vld [vmem:[#allocation2 + $0x18] sm:$0xff]
    %v142 = vmul.f32 %v40, %v138
    %v143 = vmul.f32 %v41, %v139
    %v144 = vmul.f32 %v42, %v140
    %v145 = vmul.f32 %v43, %v141
    %v146 = vmul.f32 %v44, %v138
    %v147 = vmul.f32 %v45, %v139
    %v148 = vmul.f32 %v46, %v140
    %v149 = vmul.f32 %v47, %v141
    %v150 = vmul.f32 %v48, %v138
    %v151 = vmul.f32 %v49, %v139
    %v152 = vmul.f32 %v50, %v140
    %v153 = vmul.f32 %v51, %v141
    %v154 = vmul.f32 %v52, %v138
    %v155 = vmul.f32 %v53, %v139
    %v156 = vmul.f32 %v54, %v140
    %v157 = vmul.f32 %v55, %v141
    %v158 = vmul.f32 %v56, %v138
    %v159 = vmul.f32 %v57, %v139
    %v160 = vmul.f32 %v58, %v140
    %v161 = vmul.f32 %v59, %v141
    %v162 = vmul.f32 %v60, %v138
    %v163 = vmul.f32 %v61, %v139
    %v164 = vmul.f32 %v62, %v140
    %v165 = vmul.f32 %v63, %v141
    %v166 = vmul.f32 %v64, %v138
    %v167 = vmul.f32 %v65, %v139
    %v168 = vmul.f32 %v66, %v140
    %v169 = vmul.f32 %v67, %v141
    %v170 = vmul.f32 %v68, %v138
    %v171 = vmul.f32 %v69, %v139
    %v172 = vmul.f32 %v70, %v140
    %v173 = vmul.f32 %v71, %v141
    %v174 = vmul.f32 %v72, %v138
    %v175 = vmul.f32 %v73, %v139
    %v176 = vmul.f32 %v74, %v140
    %v177 = vmul.f32 %v75, %v141
    %v178 = vmul.f32 %v76, %v138
    %v179 = vmul.f32 %v77, %v139
    %v180 = vmul.f32 %v78, %v140
    %v181 = vmul.f32 %v79, %v141
    %v182 = vmul.f32 %v80, %v138
    %v183 = vmul.f32 %v81, %v139
    %v184 = vmul.f32 %v82, %v140
    %v185 = vmul.f32 %v83, %v141
    %v186 = vmul.f32 %v84, %v138
    %v187 = vmul.f32 %v85, %v139
    %v188 = vmul.f32 %v86, %v140
    %v189 = vmul.f32 %v87, %v141
    %v190 = vmul.f32 %v88, %v138
    %v191 = vmul.f32 %v89, %v139
    %v192 = vmul.f32 %v90, %v140
    %v193 = vmul.f32 %v91, %v141
    %v194 = vmul.f32 %v92, %v138
    %v195 = vmul.f32 %v93, %v139
    %v196 = vmul.f32 %v94, %v140
    %v197 = vmul.f32 %v95, %v141
    %v198 = vmul.f32 %v96, %v138
    %v199 = vmul.f32 %v97, %v139
    %v200 = vmul.f32 %v98, %v140
    %v201 = vmul.f32 %v99, %v141
    %v202 = vmul.f32 %v100, %v138
    %v203 = vmul.f32 %v101, %v139
    %v204 = vmul.f32 %v102, %v140
    %v205 = vmul.f32 %v103, %v141
    %v206 = vadd.f32 %v142, %v143
    %v207 = vadd.f32 %v206, %v144
    %v208 = vadd.f32 %v207, %v145
    %v209 = vrot.slane %v208, 4
    %v210 = vadd.f32 %v208, %v209
    %v211 = vrot.slane %v210, 2
    %v212 = vadd.f32 %v210, %v211
    %v213 = vrot.slane %v212, 1
    %v214 = vadd.f32 %v212, %v213
    %v215 = vadd.f32 %v146, %v147
    %v216 = vadd.f32 %v215, %v148
    %v217 = vadd.f32 %v216, %v149
    %v218 = vrot.slane %v217, 4
    %v219 = vadd.f32 %v217, %v218
    %v220 = vrot.slane %v219, 2
    %v221 = vadd.f32 %v219, %v220
    %v222 = vrot.slane %v221, 1
    %v223 = vadd.f32 %v221, %v222
    %v224 = vadd.f32 %v150, %v151
    %v225 = vadd.f32 %v224, %v152
    %v226 = vadd.f32 %v225, %v153
    %v227 = vrot.slane %v226, 4
    %v228 = vadd.f32 %v226, %v227
    %v229 = vrot.slane %v228, 2
    %v230 = vadd.f32 %v228, %v229
    %v231 = vrot.slane %v230, 1
    %v232 = vadd.f32 %v230, %v231
    %v233 = vadd.f32 %v154, %v155
    %v234 = vadd.f32 %v233, %v156
    %v235 = vadd.f32 %v234, %v157
    %v236 = vrot.slane %v235, 4
    %v237 = vadd.f32 %v235, %v236
    %v238 = vrot.slane %v237, 2
    %v239 = vadd.f32 %v237, %v238
    %v240 = vrot.slane %v239, 1
    %v241 = vadd.f32 %v239, %v240
    %v242 = vadd.f32 %v158, %v159
    %v243 = vadd.f32 %v242, %v160
    %v244 = vadd.f32 %v243, %v161
    %v245 = vrot.slane %v244, 4
    %v246 = vadd.f32 %v244, %v245
    %v247 = vrot.slane %v246, 2
    %v248 = vadd.f32 %v246, %v247
    %v249 = vrot.slane %v248, 1
    %v250 = vadd.f32 %v248, %v249
    %v251 = vadd.f32 %v162, %v163
    %v252 = vadd.f32 %v251, %v164
    %v253 = vadd.f32 %v252, %v165
    %v254 = vrot.slane %v253, 4
    %v255 = vadd.f32 %v253, %v254
    %v256 = vrot.slane %v255, 2
    %v257 = vadd.f32 %v255, %v256
    %v258 = vrot.slane %v257, 1
    %v259 = vadd.f32 %v257, %v258
    %v260 = vadd.f32 %v166, %v167
    %v261 = vadd.f32 %v260, %v168
    %v262 = vadd.f32 %v261, %v169
    %v263 = vrot.slane %v262, 4
    %v264 = vadd.f32 %v262, %v263
    %v265 = vrot.slane %v264, 2
    %v266 = vadd.f32 %v264, %v265
    %v267 = vrot.slane %v266, 1
    %v268 = vadd.f32 %v266, %v267
    %v269 = vadd.f32 %v170, %v171
    %v270 = vadd.f32 %v269, %v172
    %v271 = vadd.f32 %v270, %v173
    %v272 = vrot.slane %v271, 4
    %v273 = vadd.f32 %v271, %v272
    %v274 = vrot.slane %v273, 2
    %v275 = vadd.f32 %v273, %v274
    %v276 = vrot.slane %v275, 1
    %v277 = vadd.f32 %v275, %v276
    %v278 = vadd.f32 %v174, %v175
    %v279 = vadd.f32 %v278, %v176
    %v280 = vadd.f32 %v279, %v177
    %v281 = vrot.slane %v280, 4
    %v282 = vadd.f32 %v280, %v281
    %v283 = vrot.slane %v282, 2
    %v284 = vadd.f32 %v282, %v283
    %v285 = vrot.slane %v284, 1
    %v286 = vadd.f32 %v284, %v285
    %v287 = vadd.f32 %v178, %v179
    %v288 = vadd.f32 %v287, %v180
    %v289 = vadd.f32 %v288, %v181
    %v290 = vrot.slane %v289, 4
    %v291 = vadd.f32 %v289, %v290
    %v292 = vrot.slane %v291, 2
    %v293 = vadd.f32 %v291, %v292
    %v294 = vrot.slane %v293, 1
    %v295 = vadd.f32 %v293, %v294
    %v296 = vadd.f32 %v182, %v183
    %v297 = vadd.f32 %v296, %v184
    %v298 = vadd.f32 %v297, %v185
    %v299 = vrot.slane %v298, 4
    %v300 = vadd.f32 %v298, %v299
    %v301 = vrot.slane %v300, 2
    %v302 = vadd.f32 %v300, %v301
    %v303 = vrot.slane %v302, 1
    %v304 = vadd.f32 %v302, %v303
    %v305 = vadd.f32 %v186, %v187
    %v306 = vadd.f32 %v305, %v188
    %v307 = vadd.f32 %v306, %v189
    %v308 = vrot.slane %v307, 4
    %v309 = vadd.f32 %v307, %v308
    %v310 = vrot.slane %v309, 2
    %v311 = vadd.f32 %v309, %v310
    %v312 = vrot.slane %v311, 1
    %v313 = vadd.f32 %v311, %v312
    %v314 = vadd.f32 %v190, %v191
    %v315 = vadd.f32 %v314, %v192
    %v316 = vadd.f32 %v315, %v193
    %v317 = vrot.slane %v316, 4
    %v318 = vadd.f32 %v316, %v317
    %v319 = vrot.slane %v318, 2
    %v320 = vadd.f32 %v318, %v319
    %v321 = vrot.slane %v320, 1
    %v322 = vadd.f32 %v320, %v321
    %v323 = vadd.f32 %v194, %v195
    %v324 = vadd.f32 %v323, %v196
    %v325 = vadd.f32 %v324, %v197
    %v326 = vrot.slane %v325, 4
    %v327 = vadd.f32 %v325, %v326
    %v328 = vrot.slane %v327, 2
    %v329 = vadd.f32 %v327, %v328
    %v330 = vrot.slane %v329, 1
    %v331 = vadd.f32 %v329, %v330
    %v332 = vadd.f32 %v198, %v199
    %v333 = vadd.f32 %v332, %v200
    %v334 = vadd.f32 %v333, %v201
    %v335 = vrot.slane %v334, 4
    %v336 = vadd.f32 %v334, %v335
    %v337 = vrot.slane %v336, 2
    %v338 = vadd.f32 %v336, %v337
    %v339 = vrot.slane %v338, 1
    %v340 = vadd.f32 %v338, %v339
    %v341 = vadd.f32 %v202, %v203
    %v342 = vadd.f32 %v341, %v204
    %v343 = vadd.f32 %v342, %v205
    %v344 = vrot.slane %v343, 4
    %v345 = vadd.f32 %v343, %v344
    %v346 = vrot.slane %v345, 2
    %v347 = vadd.f32 %v345, %v346
    %v348 = vrot.slane %v347, 1
    %v349 = vadd.f32 %v347, %v348
    %v352 = vrot.slane %v104, 1
    %v353 = vrot.slane %v104, 2
    %v354 = vrot.slane %v104, 3
    %v355 = vrot.slane %v104, 4
    %v356 = vrot.slane %v104, 5
    %v357 = vrot.slane %v104, 6
    %v358 = vrot.slane %v104, 7
    %v359 = vrot.slane %v105, 1
    %v360 = vrot.slane %v105, 2
    %v361 = vrot.slane %v105, 3
    %v362 = vrot.slane %v105, 4
    %v363 = vrot.slane %v105, 5
    %v364 = vrot.slane %v105, 6
    %v365 = vrot.slane %v105, 7
    %v382 = vadd.f32 %v214, %v104
    %v383 = vadd.f32 %v223, %v352
    %v384 = vadd.f32 %v232, %v353
    %v385 = vadd.f32 %v241, %v354
    %v386 = vadd.f32 %v250, %v355
    %v387 = vadd.f32 %v259, %v356
    %v388 = vadd.f32 %v268, %v357
    %v389 = vadd.f32 %v277, %v358
    %v390 = vadd.f32 %v286, %v105
    %v391 = vadd.f32 %v295, %v359
    %v392 = vadd.f32 %v304, %v360
    %v393 = vadd.f32 %v313, %v361
    %v394 = vadd.f32 %v322, %v362
    %v395 = vadd.f32 %v331, %v363
    %v396 = vadd.f32 %v340, %v364
    %v397 = vadd.f32 %v349, %v365
    %v398 = vsub.f32 0.0, %v382
    %v399 = vsub.f32 0.0, %v383
    %v400 = vsub.f32 0.0, %v384
    %v401 = vsub.f32 0.0, %v385
    %v402 = vsub.f32 0.0, %v386
    %v403 = vsub.f32 0.0, %v387
    %v404 = vsub.f32 0.0, %v388
    %v405 = vsub.f32 0.0, %v389
    %v406 = vsub.f32 0.0, %v390
    %v407 = vsub.f32 0.0, %v391
    %v408 = vsub.f32 0.0, %v392
    %v409 = vsub.f32 0.0, %v393
    %v410 = vsub.f32 0.0, %v394
    %v411 = vsub.f32 0.0, %v395
    %v412 = vsub.f32 0.0, %v396
    %v413 = vsub.f32 0.0, %v397
    %v414 = vmul.f32 %v398, 1.442695
    %v415 = vpow.pop %v414
    %v416 = vmul.f32 %v399, 1.442695
    %v417 = vpow.pop %v416
    %v418 = vmul.f32 %v400, 1.442695
    %v419 = vpow.pop %v418
    %v420 = vmul.f32 %v401, 1.442695
    %v421 = vpow.pop %v420
    %v422 = vmul.f32 %v402, 1.442695
    %v423 = vpow.pop %v422
    %v424 = vmul.f32 %v403, 1.442695
    %v425 = vpow.pop %v424
    %v426 = vmul.f32 %v404, 1.442695
    %v427 = vpow.pop %v426
    %v428 = vmul.f32 %v405, 1.442695
    %v429 = vpow.pop %v428
    %v430 = vmul.f32 %v406, 1.442695
    %v431 = vpow.pop %v430
    %v432 = vmul.f32 %v407, 1.442695
    %v433 = vpow.pop %v432
    %v434 = vmul.f32 %v408, 1.442695
    %v435 = vpow.pop %v434
    %v436 = vmul.f32 %v409, 1.442695
    %v437 = vpow.pop %v436
    %v438 = vmul.f32 %v410, 1.442695
    %v439 = vpow.pop %v438
    %v440 = vmul.f32 %v411, 1.442695
    %v441 = vpow.pop %v440
    %v442 = vmul.f32 %v412, 1.442695
    %v443 = vpow.pop %v442
    %v444 = vmul.f32 %v413, 1.442695
    %v445 = vpow.pop %v444
    %v446 = vadd.f32 %v415, 1.0
    %v447 = vadd.f32 %v417, 1.0
    %v448 = vadd.f32 %v419, 1.0
    %v449 = vadd.f32 %v421, 1.0
    %v450 = vadd.f32 %v423, 1.0
    %v451 = vadd.f32 %v425, 1.0
    %v452 = vadd.f32 %v427, 1.0
    %v453 = vadd.f32 %v429, 1.0
    %v454 = vadd.f32 %v431, 1.0
    %v455 = vadd.f32 %v433, 1.0
    %v456 = vadd.f32 %v435, 1.0
    %v457 = vadd.f32 %v437, 1.0
    %v458 = vadd.f32 %v439, 1.0
    %v459 = vadd.f32 %v441, 1.0
    %v460 = vadd.f32 %v443, 1.0
    %v461 = vadd.f32 %v445, 1.0
    %v462 = vrcp.pop %v446
    %v463 = vrcp.pop %v447
    %v464 = vrcp.pop %v448
    %v465 = vrcp.pop %v449
    %v466 = vrcp.pop %v450
    %v467 = vrcp.pop %v451
    %v468 = vrcp.pop %v452
    %v469 = vrcp.pop %v453
    %v470 = vrcp.pop %v454
    %v471 = vrcp.pop %v455
    %v472 = vrcp.pop %v456
    %v473 = vrcp.pop %v457
    %v474 = vrcp.pop %v458
    %v475 = vrcp.pop %v459
    %v476 = vrcp.pop %v460
    %v477 = vrcp.pop %v461
    %v478 = vmul.f32 %v446, %v462
    %v479 = vmul.f32 %v447, %v463
    %v480 = vmul.f32 %v448, %v464
    %v481 = vmul.f32 %v449, %v465
    %v482 = vmul.f32 %v450, %v466
    %v483 = vmul.f32 %v451, %v467
    %v484 = vmul.f32 %v452, %v468
    %v485 = vmul.f32 %v453, %v469
    %v486 = vmul.f32 %v454, %v470
    %v487 = vmul.f32 %v455, %v471
    %v488 = vmul.f32 %v456, %v472
    %v489 = vmul.f32 %v457, %v473
    %v490 = vmul.f32 %v458, %v474
    %v491 = vmul.f32 %v459, %v475
    %v492 = vmul.f32 %v460, %v476
    %v493 = vmul.f32 %v461, %v477
    %v494 = vsub.f32 2.0, %v478
    %v495 = vsub.f32 2.0, %v479
    %v496 = vsub.f32 2.0, %v480
    %v497 = vsub.f32 2.0, %v481
    %v498 = vsub.f32 2.0, %v482
    %v499 = vsub.f32 2.0, %v483
    %v500 = vsub.f32 2.0, %v484
    %v501 = vsub.f32 2.0, %v485
    %v502 = vsub.f32 2.0, %v486
    %v503 = vsub.f32 2.0, %v487
    %v504 = vsub.f32 2.0, %v488
    %v505 = vsub.f32 2.0, %v489
    %v506 = vsub.f32 2.0, %v490
    %v507 = vsub.f32 2.0, %v491
    %v508 = vsub.f32 2.0, %v492
    %v509 = vsub.f32 2.0, %v493
    %v510 = vmul.f32 %v462, %v494
    %v511 = vmul.f32 %v463, %v495
    %v512 = vmul.f32 %v464, %v496
    %v513 = vmul.f32 %v465, %v497
    %v514 = vmul.f32 %v466, %v498
    %v515 = vmul.f32 %v467, %v499
    %v516 = vmul.f32 %v468, %v500
    %v517 = vmul.f32 %v469, %v501
    %v518 = vmul.f32 %v470, %v502
    %v519 = vmul.f32 %v471, %v503
    %v520 = vmul.f32 %v472, %v504
    %v521 = vmul.f32 %v473, %v505
    %v522 = vmul.f32 %v474, %v506
    %v523 = vmul.f32 %v475, %v507
    %v524 = vmul.f32 %v476, %v508
    %v525 = vmul.f32 %v477, %v509
    %v542 = vrot.slane %v511, 7
    %vm543 = vcmask 1041409
    %v544 = vsel %vm543, %v542, %v510
    %v545 = vrot.slane %v512, 6
    %vm546 = vcmask 1042434
    %v547 = vsel %vm546, %v545, %v544
    %v548 = vrot.slane %v513, 5
    %vm549 = vcmask 1043459
    %v550 = vsel %vm549, %v548, %v547
    %v551 = vrot.slane %v514, 4
    %vm552 = vcmask 1044484
    %v553 = vsel %vm552, %v551, %v550
    %v554 = vrot.slane %v515, 3
    %vm555 = vcmask 1045509
    %v556 = vsel %vm555, %v554, %v553
    %v557 = vrot.slane %v516, 2
    %vm558 = vcmask 1046534
    %v559 = vsel %vm558, %v557, %v556
    %v560 = vrot.slane %v517, 1
    %vm561 = vcmask 1047559
    %v562 = vsel %vm561, %v560, %v559
    %v563 = vrot.slane %v519, 7
    %v564 = vsel %vm543, %v563, %v518
    %v565 = vrot.slane %v520, 6
    %v566 = vsel %vm546, %v565, %v564
    %v567 = vrot.slane %v521, 5
    %v568 = vsel %vm549, %v567, %v566
    %v569 = vrot.slane %v522, 4
    %v570 = vsel %vm552, %v569, %v568
    %v571 = vrot.slane %v523, 3
    %v572 = vsel %vm555, %v571, %v570
    %v573 = vrot.slane %v524, 2
    %v574 = vsel %vm558, %v573, %v572
    %v575 = vrot.slane %v525, 1
    %v576 = vsel %vm561, %v575, %v574
    %v579 = vmul.f32 %v106, %v562
    %v580 = vmul.f32 %v107, %v576
    %v581 = vmul.f32 %v108, %v562
    %v582 = vmul.f32 %v109, %v576
    %v583 = vmul.f32 %v110, %v562
    %v584 = vmul.f32 %v111, %v576
    %v585 = vmul.f32 %v112, %v562
    %v586 = vmul.f32 %v113, %v576
    %v587 = vmul.f32 %v114, %v562
    %v588 = vmul.f32 %v115, %v576
    %v589 = vmul.f32 %v116, %v562
    %v590 = vmul.f32 %v117, %v576
    %v591 = vmul.f32 %v118, %v562
    %v592 = vmul.f32 %v119, %v576
    %v593 = vmul.f32 %v120, %v562
    %v594 = vmul.f32 %v121, %v576
    %v595 = vadd.f32 %v579, %v580
    %v596 = vrot.slane %v595, 4
    %v597 = vadd.f32 %v595, %v596
    %v598 = vrot.slane %v597, 2
    %v599 = vadd.f32 %v597, %v598
    %v600 = vrot.slane %v599, 1
    %v601 = vadd.f32 %v599, %v600
    %v602 = vadd.f32 %v581, %v582
    %v603 = vrot.slane %v602, 4
    %v604 = vadd.f32 %v602, %v603
    %v605 = vrot.slane %v604, 2
    %v606 = vadd.f32 %v604, %v605
    %v607 = vrot.slane %v606, 1
    %v608 = vadd.f32 %v606, %v607
    %v609 = vadd.f32 %v583, %v584
    %v610 = vrot.slane %v609, 4
    %v611 = vadd.f32 %v609, %v610
    %v612 = vrot.slane %v611, 2
    %v613 = vadd.f32 %v611, %v612
    %v614 = vrot.slane %v613, 1
    %v615 = vadd.f32 %v613, %v614
    %v616 = vadd.f32 %v585, %v586
    %v617 = vrot.slane %v616, 4
    %v618 = vadd.f32 %v616, %v617
    %v619 = vrot.slane %v618, 2
    %v620 = vadd.f32 %v618, %v619
    %v621 = vrot.slane %v620, 1
    %v622 = vadd.f32 %v620, %v621
    %v623 = vadd.f32 %v587, %v588
    %v624 = vrot.slane %v623, 4
    %v625 = vadd.f32 %v623, %v624
    %v626 = vrot.slane %v625, 2
    %v627 = vadd.f32 %v625, %v626
    %v628 = vrot.slane %v627, 1
    %v629 = vadd.f32 %v627, %v628
    %v630 = vadd.f32 %v589, %v590
    %v631 = vrot.slane %v630, 4
    %v632 = vadd.f32 %v630, %v631
    %v633 = vrot.slane %v632, 2
    %v634 = vadd.f32 %v632, %v633
    %v635 = vrot.slane %v634, 1
    %v636 = vadd.f32 %v634, %v635
    %v637 = vadd.f32 %v591, %v592
    %v638 = vrot.slane %v637, 4
    %v639 = vadd.f32 %v637, %v638
    %v640 = vrot.slane %v639, 2
    %v641 = vadd.f32 %v639, %v640
    %v642 = vrot.slane %v641, 1
    %v643 = vadd.f32 %v641, %v642
    %v644 = vadd.f32 %v593, %v594
    %v645 = vrot.slane %v644, 4
    %v646 = vadd.f32 %v644, %v645
    %v647 = vrot.slane %v646, 2
    %v648 = vadd.f32 %v646, %v647
    %v649 = vrot.slane %v648, 1
    %v650 = vadd.f32 %v648, %v649
    %v652 = vrot.slane %v122, 1
    %v653 = vrot.slane %v122, 2
    %v654 = vrot.slane %v122, 3
    %v655 = vrot.slane %v122, 4
    %v656 = vrot.slane %v122, 5
    %v657 = vrot.slane %v122, 6
    %v658 = vrot.slane %v122, 7
    %v667 = vadd.f32 %v601, %v122
    %v668 = vadd.f32 %v608, %v652
    %v669 = vadd.f32 %v615, %v653
    %v670 = vadd.f32 %v622, %v654
    %v671 = vadd.f32 %v629, %v655
    %v672 = vadd.f32 %v636, %v656
    %v673 = vadd.f32 %v643, %v657
    %v674 = vadd.f32 %v650, %v658
    %v675 = vsub.f32 0.0, %v667
    %v676 = vsub.f32 0.0, %v668
    %v677 = vsub.f32 0.0, %v669
    %v678 = vsub.f32 0.0, %v670
    %v679 = vsub.f32 0.0, %v671
    %v680 = vsub.f32 0.0, %v672
    %v681 = vsub.f32 0.0, %v673
    %v682 = vsub.f32 0.0, %v674
    %v683 = vmul.f32 %v675, 1.442695
    %v684 = vpow.pop %v683
    %v685 = vmul.f32 %v676, 1.442695
    %v686 = vpow.pop %v685
    %v687 = vmul.f32 %v677, 1.442695
    %v688 = vpow.pop %v687
    %v689 = vmul.f32 %v678, 1.442695
    %v690 = vpow.pop %v689
    %v691 = vmul.f32 %v679, 1.442695
    %v692 = vpow.pop %v691
    %v693 = vmul.f32 %v680, 1.442695
    %v694 = vpow.pop %v693
    %v695 = vmul.f32 %v681, 1.442695
    %v696 = vpow.pop %v695
    %v697 = vmul.f32 %v682, 1.442695
    %v698 = vpow.pop %v697
    %v699 = vadd.f32 %v684, 1.0
    %v700 = vadd.f32 %v686, 1.0
    %v701 = vadd.f32 %v688, 1.0
    %v702 = vadd.f32 %v690, 1.0
    %v703 = vadd.f32 %v692, 1.0
    %v704 = vadd.f32 %v694, 1.0
    %v705 = vadd.f32 %v696, 1.0
    %v706 = vadd.f32 %v698, 1.0
    %v707 = vrcp.pop %v699
    %v708 = vrcp.pop %v700
    %v709 = vrcp.pop %v701
    %v710 = vrcp.pop %v702
    %v711 = vrcp.pop %v703
    %v712 = vrcp.pop %v704
    %v713 = vrcp.pop %v705
    %v714 = vrcp.pop %v706
    %v715 = vmul.f32 %v699, %v707
    %v716 = vmul.f32 %v700, %v708
    %v717 = vmul.f32 %v701, %v709
    %v718 = vmul.f32 %v702, %v710
    %v719 = vmul.f32 %v703, %v711
    %v720 = vmul.f32 %v704, %v712
    %v721 = vmul.f32 %v705, %v713
    %v722 = vmul.f32 %v706, %v714
    %v723 = vsub.f32 2.0, %v715
    %v724 = vsub.f32 2.0, %v716
    %v725 = vsub.f32 2.0, %v717
    %v726 = vsub.f32 2.0, %v718
    %v727 = vsub.f32 2.0, %v719
    %v728 = vsub.f32 2.0, %v720
    %v729 = vsub.f32 2.0, %v721
    %v730 = vsub.f32 2.0, %v722
    %v731 = vmul.f32 %v707, %v723
    %v732 = vmul.f32 %v708, %v724
    %v733 = vmul.f32 %v709, %v725
    %v734 = vmul.f32 %v710, %v726
    %v735 = vmul.f32 %v711, %v727
    %v736 = vmul.f32 %v712, %v728
    %v737 = vmul.f32 %v713, %v729
    %v738 = vmul.f32 %v714, %v730
    %v747 = vrot.slane %v732, 7
    %v748 = vsel %vm543, %v747, %v731
    %v749 = vrot.slane %v733, 6
    %v750 = vsel %vm546, %v749, %v748
    %v751 = vrot.slane %v734, 5
    %v752 = vsel %vm549, %v751, %v750
    %v753 = vrot.slane %v735, 4
    %v754 = vsel %vm552, %v753, %v752
    %v755 = vrot.slane %v736, 3
    %v756 = vsel %vm555, %v755, %v754
    %v757 = vrot.slane %v737, 2
    %v758 = vsel %vm558, %v757, %v756
    %v759 = vrot.slane %v738, 1
    %v760 = vsel %vm561, %v759, %v758
    %v762 = vmul.f32 %v123, %v760
    %v763 = vmul.f32 %v124, %v760
    %v764 = vmul.f32 %v125, %v760
    %v765 = vmul.f32 %v126, %v760
    %v766 = vmul.f32 %v127, %v760
    %v767 = vmul.f32 %v128, %v760
    %v768 = vmul.f32 %v129, %v760
    %v769 = vmul.f32 %v130, %v760
    %v770 = vrot.slane %v762, 4
    %v771 = vadd.f32 %v762, %v770
    %v772 = vrot.slane %v771, 2
    %v773 = vadd.f32 %v771, %v772
    %v774 = vrot.slane %v773, 1
    %v775 = vadd.f32 %v773, %v774
    %v776 = vrot.slane %v763, 4
    %v777 = vadd.f32 %v763, %v776
    %v778 = vrot.slane %v777, 2
    %v779 = vadd.f32 %v777, %v778
    %v780 = vrot.slane %v779, 1
    %v781 = vadd.f32 %v779, %v780
    %v782 = vrot.slane %v764, 4
    %v783 = vadd.f32 %v764, %v782
    %v784 = vrot.slane %v783, 2
    %v785 = vadd.f32 %v783, %v784
    %v786 = vrot.slane %v785, 1
    %v787 = vadd.f32 %v785, %v786
    %v788 = vrot.slane %v765, 4
    %v789 = vadd.f32 %v765, %v788
    %v790 = vrot.slane %v789, 2
    %v791 = vadd.f32 %v789, %v790
    %v792 = vrot.slane %v791, 1
    %v793 = vadd.f32 %v791, %v792
    %v794 = vrot.slane %v766, 4
    %v795 = vadd.f32 %v766, %v794
    %v796 = vrot.slane %v795, 2
    %v797 = vadd.f32 %v795, %v796
    %v798 = vrot.slane %v797, 1
    %v799 = vadd.f32 %v797, %v798
    %v800 = vrot.slane %v767, 4
    %v801 = vadd.f32 %v767, %v800
    %v802 = vrot.slane %v801, 2
    %v803 = vadd.f32 %v801, %v802
    %v804 = vrot.slane %v803, 1
    %v805 = vadd.f32 %v803, %v804
    %v806 = vrot.slane %v768, 4
    %v807 = vadd.f32 %v768, %v806
    %v808 = vrot.slane %v807, 2
    %v809 = vadd.f32 %v807, %v808
    %v810 = vrot.slane %v809, 1
    %v811 = vadd.f32 %v809, %v810
    %v812 = vrot.slane %v769, 4
    %v813 = vadd.f32 %v769, %v812
    %v814 = vrot.slane %v813, 2
    %v815 = vadd.f32 %v813, %v814
    %v816 = vrot.slane %v815, 1
    %v817 = vadd.f32 %v815, %v816
    %v819 = vrot.slane %v131, 1
    %v820 = vrot.slane %v131, 2
    %v821 = vrot.slane %v131, 3
    %v822 = vrot.slane %v131, 4
    %v823 = vrot.slane %v131, 5
    %v824 = vrot.slane %v131, 6
    %v825 = vrot.slane %v131, 7
    %v834 = vadd.f32 %v775, %v131
    %v835 = vadd.f32 %v781, %v819
    %v836 = vadd.f32 %v787, %v820
    %v837 = vadd.f32 %v793, %v821
    %v838 = vadd.f32 %v799, %v822
    %v839 = vadd.f32 %v805, %v823
    %v840 = vadd.f32 %v811, %v824
    %v841 = vadd.f32 %v817, %v825
    %v842 = vsub.f32 0.0, %v834
    %v843 = vsub.f32 0.0, %v835
    %v844 = vsub.f32 0.0, %v836
    %v845 = vsub.f32 0.0, %v837
    %v846 = vsub.f32 0.0, %v838
    %v847 = vsub.f32 0.0, %v839
    %v848 = vsub.f32 0.0, %v840
    %v849 = vsub.f32 0.0, %v841
    %v850 = vmul.f32 %v842, 1.442695
    %v851 = vpow.pop %v850
    %v852 = vmul.f32 %v843, 1.442695
    %v853 = vpow.pop %v852
    %v854 = vmul.f32 %v844, 1.442695
    %v855 = vpow.pop %v854
    %v856 = vmul.f32 %v845, 1.442695
    %v857 = vpow.pop %v856
    %v858 = vmul.f32 %v846, 1.442695
    %v859 = vpow.pop %v858
    %v860 = vmul.f32 %v847, 1.442695
    %v861 = vpow.pop %v860
    %v862 = vmul.f32 %v848, 1.442695
    %v863 = vpow.pop %v862
    %v864 = vmul.f32 %v849, 1.442695
    %v865 = vpow.pop %v864
    %v866 = vadd.f32 %v851, 1.0
    %v867 = vadd.f32 %v853, 1.0
    %v868 = vadd.f32 %v855, 1.0
    %v869 = vadd.f32 %v857, 1.0
    %v870 = vadd.f32 %v859, 1.0
    %v871 = vadd.f32 %v861, 1.0
    %v872 = vadd.f32 %v863, 1.0
    %v873 = vadd.f32 %v865, 1.0
    %v874 = vrcp.pop %v866
    %v875 = vrcp.pop %v867
    %v876 = vrcp.pop %v868
    %v877 = vrcp.pop %v869
    %v878 = vrcp.pop %v870
    %v879 = vrcp.pop %v871
    %v880 = vrcp.pop %v872
    %v881 = vrcp.pop %v873
    %v882 = vmul.f32 %v866, %v874
    %v883 = vmul.f32 %v867, %v875
    %v884 = vmul.f32 %v868, %v876
    %v885 = vmul.f32 %v869, %v877
    %v886 = vmul.f32 %v870, %v878
    %v887 = vmul.f32 %v871, %v879
    %v888 = vmul.f32 %v872, %v880
    %v889 = vmul.f32 %v873, %v881
    %v890 = vsub.f32 2.0, %v882
    %v891 = vsub.f32 2.0, %v883
    %v892 = vsub.f32 2.0, %v884
    %v893 = vsub.f32 2.0, %v885
    %v894 = vsub.f32 2.0, %v886
    %v895 = vsub.f32 2.0, %v887
    %v896 = vsub.f32 2.0, %v888
    %v897 = vsub.f32 2.0, %v889
    %v898 = vmul.f32 %v874, %v890
    %v899 = vmul.f32 %v875, %v891
    %v900 = vmul.f32 %v876, %v892
    %v901 = vmul.f32 %v877, %v893
    %v902 = vmul.f32 %v878, %v894
    %v903 = vmul.f32 %v879, %v895
    %v904 = vmul.f32 %v880, %v896
    %v905 = vmul.f32 %v881, %v897
    %v914 = vrot.slane %v899, 7
    %v915 = vsel %vm543, %v914, %v898
    %v916 = vrot.slane %v900, 6
    %v917 = vsel %vm546, %v916, %v915
    %v918 = vrot.slane %v901, 5
    %v919 = vsel %vm549, %v918, %v917
    %v920 = vrot.slane %v902, 4
    %v921 = vsel %vm552, %v920, %v919
    %v922 = vrot.slane %v903, 3
    %v923 = vsel %vm555, %v922, %v921
    %v924 = vrot.slane %v904, 2
    %v925 = vsel %vm558, %v924, %v923
    %v926 = vrot.slane %v905, 1
    %v927 = vsel %vm561, %v926, %v925
    %v929 = vmul.f32 %v132, %v927
    %v930 = vmul.f32 %v133, %v927
    %v931 = vmul.f32 %v134, %v927
    %v932 = vmul.f32 %v135, %v927
    %v933 = vrot.slane %v929, 4
    %v934 = vadd.f32 %v929, %v933
    %v935 = vrot.slane %v934, 2
    %v936 = vadd.f32 %v934, %v935
    %v937 = vrot.slane %v936, 1
    %v938 = vadd.f32 %v936, %v937
    %v939 = vrot.slane %v930, 4
    %v940 = vadd.f32 %v930, %v939
    %v941 = vrot.slane %v940, 2
    %v942 = vadd.f32 %v940, %v941
    %v943 = vrot.slane %v942, 1
    %v944 = vadd.f32 %v942, %v943
    %v945 = vrot.slane %v931, 4
    %v946 = vadd.f32 %v931, %v945
    %v947 = vrot.slane %v946, 2
    %v948 = vadd.f32 %v946, %v947
    %v949 = vrot.slane %v948, 1
    %v950 = vadd.f32 %v948, %v949
    %v951 = vrot.slane %v932, 4
    %v952 = vadd.f32 %v932, %v951
    %v953 = vrot.slane %v952, 2
    %v954 = vadd.f32 %v952, %v953
    %v955 = vrot.slane %v954, 1
    %v956 = vadd.f32 %v954, %v955
    %v958 = vrot.slane %v136, 1
    %v959 = vrot.slane %v136, 2
    %v960 = vrot.slane %v136, 3
    %v965 = vadd.f32 %v938, %v136
    %v966 = vadd.f32 %v944, %v958
    %v967 = vadd.f32 %v950, %v959
    %v968 = vadd.f32 %v956, %v960
    %v969 = vsub.f32 0.0, %v965
    %v970 = vsub.f32 0.0, %v966
    %v971 = vsub.f32 0.0, %v967
    %v972 = vsub.f32 0.0, %v968
    %v973 = vmul.f32 %v969, 1.442695
    %v974 = vpow.pop %v973
    %v975 = vmul.f32 %v970, 1.442695
    %v976 = vpow.pop %v975
    %v977 = vmul.f32 %v971, 1.442695
    %v978 = vpow.pop %v977
    %v979 = vmul.f32 %v972, 1.442695
    %v980 = vpow.pop %v979
    %v981 = vadd.f32 %v974, 1.0
    %v982 = vadd.f32 %v976, 1.0
    %v983 = vadd.f32 %v978, 1.0
    %v984 = vadd.f32 %v980, 1.0
    %v985 = vrcp.pop %v981
    %v986 = vrcp.pop %v982
    %v987 = vrcp.pop %v983
    %v988 = vrcp.pop %v984
    %v989 = vmul.f32 %v981, %v985
    %v990 = vmul.f32 %v982, %v986
    %v991 = vmul.f32 %v983, %v987
    %v992 = vmul.f32 %v984, %v988
    %v993 = vsub.f32 2.0, %v989
    %v994 = vsub.f32 2.0, %v990
    %v995 = vsub.f32 2.0, %v991
    %v996 = vsub.f32 2.0, %v992
    %v997 = vmul.f32 %v985, %v993
    %v998 = vmul.f32 %v986, %v994
    %v999 = vmul.f32 %v987, %v995
    %v1000 = vmul.f32 %v988, %v996
    %v1005 = vrot.slane %v998, 7
    %v1006 = vsel %vm543, %v1005, %v997
    %v1007 = vrot.slane %v999, 6
    %v1008 = vsel %vm546, %v1007, %v1006
    %v1009 = vrot.slane %v1000, 5
    %v1010 = vsel %vm549, %v1009, %v1008
    %v1012 = vmul.f32 %v137, %v1010
    %vm1013 = vcmask 1043456
    %v1014 = vsel %vm1013, %v1012, 0.0
    %v1015 = vrot.slane %v1014, 4
    %v1016 = vadd.f32 %v1014, %v1015
    %v1017 = vrot.slane %v1016, 2
    %v1018 = vadd.f32 %v1016, %v1017
    %v1019 = vrot.slane %v1018, 1
    %v1020 = vadd.f32 %v1018, %v1019
    %v1021 = vadd.f32 %v1020, %v137
    %1022 = vst [vmem:[#allocation7 - $0x4] sm:$0x10] %v1021
    // Predicated region
    $region18: #{tpu_custom_call.1} parent=1 // pred_check
      _
    $region19: #{tpu_custom_call.1} parent=1 // pred_check_branch
      %1024 = sbr.rel (0) target = $region21
    $region20: #{tpu_custom_call.1} parent=1 // pred_region
      %s1026 = ssub.s32 16, 16
      %1027 = vsyncadd [#allocation4], %s1026
      %s1029 = sshll.u32 [#allocation7], 4
      %s1030 = int_to_ptr.vmem [resolvable:$true] %s1029
      %1032 = dma.vmem_to_hbm [thread:$0]  %s1030, 16, %s2, [#allocation4]
    $region21: #{tpu_custom_call.1} parent=1 // pred_fallthru
      _
    // Predicated region
    $region22: #{tpu_custom_call.1} parent=1 // pred_check
      _
    $region23: #{tpu_custom_call.1} parent=1 // pred_check_branch
      %1034 = sbr.rel (0) target = $region25
    $region24: #{tpu_custom_call.1} parent=1 // pred_region
      %1035 = dma.done [#allocation4], 16
    $region25: #{tpu_custom_call.1} parent=1 // pred_fallthru
      _
    %1036 = vsyncpa [#allocation3], 1
    %1037 = vsyncpa [#allocation6], 1
    %1038 = vsyncpa [#allocation4], 1

</llo_original>
